<compile_context>
chip_gen: v7x
topology: tpu7x:2x2x1
jax: 0.10.0
libtpu: 0.0.40
codegen_flags: <defaults>
</compile_context>

<pallas_src>
import jax
import jax.numpy as jnp
import numpy as np
from jax.experimental import pallas as pl
from jax.experimental.pallas import tpu as pltpu


def _fused_logits_kernel(w_ref, x_ref, o_ref):
    """One streamed tile of  logits = W_all @ X^T.

    w_ref : (H_total, D)   all weight keys concatenated on the head axis
                           (grid-invariant block: constant index_map, no re-DMA)
    x_ref : (T, D)         T rows of the flattened (N, D) memory tensor
    o_ref : (H_total, T)   lane-dense output tile (T on the lane axis)
    """
    # Contract over d_model: (H_total, D) . (T, D) -> (H_total, T), f32 accum.
    # Matches torch.matmul(weight_key, tensor.transpose(-1, -2)).
    o_ref[...] = jax.lax.dot_general(
        w_ref[...], x_ref[...],
        dimension_numbers=(((1,), (1,)), ((), ())),
        preferred_element_type=jnp.float32,
    ).astype(o_ref.dtype)


def _round_up(x: int, m: int) -> int:
    return ((x + m - 1) // m) * m


def _pick_row_tile(n_rows: int, d_model: int, h_total: int, itemsize: int,
                   max_tile: int = 16384,
                   vmem_budget_bytes: int = 20 * 1024 * 1024) -> int:
    """Streamed-row tile: full extent if it fits, else a 128-multiple tile.

    VMEM cost per streamed row (double buffered):
      x block (T, D):        D lane-padded to a multiple of 128 lanes
      out block (H_total, T): H_total sublane-padded to a multiple of 8
    """
    x_row_bytes = _round_up(max(d_model, 1), 128) * itemsize
    o_col_bytes = _round_up(max(h_total, 1), 8) * itemsize
    per_row = 2 * (x_row_bytes + o_col_bytes)          # double buffered
    t_budget = max(vmem_budget_bytes // per_row, 128)
    tile = min(n_rows, max_tile, t_budget)
    if tile < n_rows:
        # Guard: tiles that are not the full extent must be lane-dense
        # (multiple of 128) regardless of the caller-supplied max_tile.
        tile = max(128, (tile // 128) * 128)
    return tile


def fused_weight_logits(w_all: jax.Array, tensor: jax.Array, *,
                        max_tile: int = 16384,
                        vmem_budget_bytes: int = 20 * 1024 * 1024,
                        vmem_limit_bytes: int = 32 * 1024 * 1024) -> jax.Array:
    """Compute logits for all weight sets with one pallas_call.

    w_all  : (H_total, D)
    tensor : (...batch, M, D)
    returns: (H_total, ...batch, M)   (kernel-native layout; caller transposes)
    """
    H_total, D = w_all.shape
    *batch_shape, M, Dx = tensor.shape
    assert D == Dx, "d_model mismatch"
    N = int(np.prod(batch_shape, dtype=np.int64)) * M

    x_flat = tensor.reshape(N, D)            # free view: row-major over (batch, M)
    itemsize = int(jnp.dtype(tensor.dtype).itemsize)
    T = _pick_row_tile(N, D, H_total, itemsize, max_tile, vmem_budget_bytes)
    grid = (pl.cdiv(N, T),)

    cost = pl.CostEstimate(
        flops=2 * H_total * D * N,
        transcendentals=0,
        bytes_accessed=itemsize * (N * D + H_total * N + H_total * D),
    )

    out = pl.pallas_call(
        _fused_logits_kernel,
        out_shape=jax.ShapeDtypeStruct((H_total, N), tensor.dtype),
        grid=grid,
        in_specs=[
            # Fused weight keys: same full block every step (no re-DMA).
            pl.BlockSpec((H_total, D), lambda i: (0, 0)),
            # Streamed memory rows: one T-row tile per grid step.
            pl.BlockSpec((T, D), lambda i: (i, 0)),
        ],
        # Lane-dense output: streamed dimension on the last (lane) axis.
        out_specs=pl.BlockSpec((H_total, T), lambda i: (0, i)),
        compiler_params=pltpu.CompilerParams(
            dimension_semantics=("parallel",),
            vmem_limit_bytes=vmem_limit_bytes,
        ),
        cost_estimate=cost,
    )(w_all, x_flat)

    # (H_total, N) -> (H_total, ...batch, M)   (pure reshape, no data movement)
    return out.reshape((H_total, *batch_shape, M))


class TensorBasedSetupJAX:
    """JAX/Pallas port of TensorBasedSetup (empty ensemble_shape)."""

    MEMORY_NAME = "Memory"

    def __init__(self, d_model: int, weight_info: dict, key: jax.Array,
                 dtype=jnp.float32):
        self.d_model = d_model
        self.weight_info = dict(weight_info)
        self.weight_keys = {}
        self.head_slices = {}
        offset = 0
        # Deterministic kaiming_normal init: std = sqrt(2 / fan_in), fan_in = d_model
        std = float(np.sqrt(2.0 / d_model))
        for name, num_heads in self.weight_info.items():
            key, sub = jax.random.split(key)
            self.weight_keys[name] = (
                std * jax.random.normal(sub, (num_heads, d_model))
            ).astype(dtype)
            self.head_slices[name] = (offset, num_heads)
            offset += num_heads
        self.total_heads = offset

    def _fused_weights(self) -> jax.Array:
        # Rebuilt fresh each call (tiny H_total x D concat) so the fused buffer
        # can never go stale relative to the per-name parameters.
        return jnp.concatenate(
            [self.weight_keys[name] for name in self.weight_info], axis=0)

    def __call__(self, tensor: jax.Array, *, max_tile: int = 16384) -> dict:
        """tensor: (...batch, mem_items, d_model) -> bundle dict of arrays."""
        bundle = {self.MEMORY_NAME: tensor}
        logits_flat = fused_weight_logits(self._fused_weights(), tensor,
                                          max_tile=max_tile)   # (H_total, ...batch, M)
        for name, (start, num_heads) in self.head_slices.items():
            # Leading-axis slice is contiguous; the transpose to the module's
            # (...batch, H_name, M) layout is one fused XLA copy per name.
            bundle[name] = jnp.moveaxis(logits_flat[start:start + num_heads], 0, -2)
        # TODO(synk): emitting per-name (...batch, H, M) outputs directly from the
        # pallas_call would remove that copy, but requires an in-kernel
        # sublane/major relayout of the matmul result; kept out for lowering
        # robustness on the Mosaic backend.
        # TODO(synk): BundleTensor constraint/name metadata is string bookkeeping,
        # not a tensor op; only the tensor contents are produced.
        return bundle


if __name__ == "__main__":
    rng = jax.random.PRNGKey(0)

    d_model = 32
    weight_info = {
        "Reader_Weights_Logits_0": 4,   # 4 read heads
        "Writer_Weights_Logits_0": 8,   # 8 write heads
    }

    rng, k_params = jax.random.split(rng)
    layer = TensorBasedSetupJAX(d_model, weight_info, key=k_params)

    def check_bundle(x):
        bundle = layer(x)
        bundle = {k: jax.block_until_ready(v) for k, v in bundle.items()}
        ok = bool(jnp.array_equal(bundle["Memory"], x))
        for name, wkey in layer.weight_keys.items():
            ref = jnp.einsum("hd,...md->...hm", wkey, x)
            ok &= bool(jnp.allclose(bundle[name], ref, atol=1e-4, rtol=1e-4))
        return ok

    ok = True

    # Small shape consistent with the module's forward contract
    # (single grid step: block == full extent on every axis).
    rng, k1 = jax.random.split(rng)
    x_small = jax.random.normal(k1, (2, 16, d_model), dtype=jnp.float32)
    ok &= check_bundle(x_small)

    # Multiple batch dimensions.
    rng, k2 = jax.random.split(rng)
    x_multi = jax.random.normal(k2, (2, 3, 16, d_model), dtype=jnp.float32)
    ok &= check_bundle(x_multi)

    # Exercise the tiled multi-step path at small scale: force a small,
    # non-128-multiple max_tile so the 128-rounding guard and a partial last
    # tile are both hit (N = 4*256 = 1024, T -> 384, grid of 3 steps).
    rng, k3 = jax.random.split(rng)
    x_big = jax.random.normal(k3, (4, 256, d_model), dtype=jnp.float32)
    w_all = layer._fused_weights()
    tiled = jax.block_until_ready(
        fused_weight_logits(w_all, x_big, max_tile=400))
    ref = jnp.einsum("hd,bmd->hbm", w_all, x_big)
    ok &= bool(jnp.allclose(tiled, ref, atol=1e-4, rtol=1e-4))

    print("KERNEL_OK" if ok else "KERNEL_MISMATCH")
</pallas_src>

<mosaic_0001>
module attributes {stable_mosaic.version = 11 : i64} {
  func.func @_fused_logits_kernel(%arg0: i32, %arg1: memref<12x32xf32, #tpu.memory_space<vmem>>, %arg2: memref<32x32xf32, #tpu.memory_space<vmem>>, %arg3: memref<12x32xf32, #tpu.memory_space<vmem>>) attributes {dimension_semantics = [#tpu.dimension_semantics<parallel>], iteration_bounds = array<i64: 1>, scalar_prefetch = 0 : i64, scratch_operands = 0 : i64, tpu.core_type = #tpu.core_type<tc>, window_params = [{pipeline_mode = #tpu.pipeline_mode<synchronous>, transform_indices = @transform_0, window_bounds = array<i64: 12, 32>}, {transform_indices = @transform_1, window_bounds = array<i64: 32, 32>}, {transform_indices = @transform_2, window_bounds = array<i64: 12, 32>}]} {
    %c0 = arith.constant 0 : index
    %c0_0 = arith.constant 0 : index
    %0 = vector.load %arg1[%c0, %c0_0] : memref<12x32xf32, #tpu.memory_space<vmem>>, vector<12x32xf32>
    %c0_1 = arith.constant 0 : index
    %c0_2 = arith.constant 0 : index
    %1 = vector.load %arg2[%c0_1, %c0_2] : memref<32x32xf32, #tpu.memory_space<vmem>>, vector<32x32xf32>
    %cst = arith.constant dense<0.000000e+00> : vector<12x32xf32>
    %2 = tpu.matmul %0, %1, %cst {dimension_numbers = #tpu.dot_dimension_numbers<[1], [1], [0], [0], [0, 0, 1, 0], [], []>} : vector<12x32xf32>, vector<32x32xf32>, vector<12x32xf32> -> vector<12x32xf32>
    %c0_3 = arith.constant 0 : index
    %c0_4 = arith.constant 0 : index
    %3 = vector.load %arg3[%c0_3, %c0_4] : memref<12x32xf32, #tpu.memory_space<vmem>>, vector<12x32xf32>
    tpu.vector_store %arg3[%c0_3, %c0_4], %2 {strides = array<i32>} : memref<12x32xf32, #tpu.memory_space<vmem>>, vector<12x32xf32>,
    return
  }
  func.func @transform_0(%arg0: i32) -> (i32, i32) {
    %c0_i32 = arith.constant 0 : i32
    %c0_i32_0 = arith.constant 0 : i32
    %c0_i32_1 = arith.constant 0 : i32
    return %c0_i32, %c0_i32_0 : i32, i32
  }
  func.func @transform_1(%arg0: i32) -> (i32, i32) {
    %c0_i32 = arith.constant 0 : i32
    %c0_i32_0 = arith.constant 0 : i32
    return %arg0, %c0_i32 : i32, i32
  }
  func.func @transform_2(%arg0: i32) -> (i32, i32) {
    %c0_i32 = arith.constant 0 : i32
    %c0_i32_0 = arith.constant 0 : i32
    return %c0_i32, %arg0 : i32, i32
  }
}

</mosaic_0001>

<llo_original>
// kernel: tpu_custom_call.1
$region0: #{tpu_custom_call.1}
  #allocation0 [shape = 'u32[]', space=smem, size = 0x4, offset = 0x4, fixed_abs, tag = 'smem constant byte address 0x4 - core index']
  #allocation1 [shape = 'u32[144,128]{1,0:T(1,128)}', space=vmem, size = 0x12000, scoped, tag = 'internal scratch']
  %s0 = inlined_call_operand.hbm [shape: f32[12,32], index: 0, kind: input, shape index: {}]
  %s1 = inlined_call_operand.hbm [shape: f32[32,32], index: 1, kind: input, shape index: {}]
  %s2 = inlined_call_operand.hbm [shape: f32[12,32], index: 2, kind: output, shape index: {}]
  %s3 = sld [smem:[#allocation0]]
  $region26: #{tpu_custom_call.1} parent=0
    _
  %s5 = ssub.s32 1, %s3
  %s6 = scalar_select 0, %s5, %s3
  $region1: #{tpu_custom_call.1} parent=0
    #allocation2 [shape = 'u8[8192]{0}', space=vmem, size = 0x2000, scoped, tag = 'input window, operand 0, single buffered']
    #allocation3 [shape = 's32[1]{0}', space=sflag, size = 0x4, scoped, tag = 'scoped memory for tpu_custom_call.1']
    #allocation4 [shape = 's32[1]{0}', space=sflag, size = 0x4, scoped, tag = 'scoped memory for tpu_custom_call.1']
    #allocation5 [shape = 'u8[16384]{0}', space=vmem, size = 0x4000, scoped, tag = 'input window, operand 1, single buffered']
    #allocation6 [shape = 's32[1]{0}', space=sflag, size = 0x4, scoped, tag = 'scoped memory for tpu_custom_call.1']
    #allocation7 [shape = 'u8[8192]{0}', space=vmem, size = 0x2000, scoped, tag = 'output window, operand 0, single buffered']
    %7 = vsyncpa [#allocation3], 0
    %8 = vsyncpa [#allocation6], 0
    %9 = vsyncpa [#allocation4], 0
    // Predicated region
    $region2: #{tpu_custom_call.1} parent=1 // pred_check
      _
    $region3: #{tpu_custom_call.1} parent=1 // pred_check_branch
      %11 = sbr.rel (0) target = $region5
    $region4: #{tpu_custom_call.1} parent=1 // pred_region
      %s13 = ssub.s32 256, 256
      %14 = vsyncadd [#allocation3], %s13
      %s15 = sshll.u32 [#allocation2], 4
      %s16 = int_to_ptr.vmem [resolvable:$true] %s15
      %21 = dma.hbm_to_vmem [thread:$0]  %s0, 256, %s16, [#allocation3], 128, 128, 8
    $region5: #{tpu_custom_call.1} parent=1 // pred_fallthru
      _
    // Predicated region
    $region6: #{tpu_custom_call.1} parent=1 // pred_check
      _
    $region7: #{tpu_custom_call.1} parent=1 // pred_check_branch
      %23 = sbr.rel (0) target = $region9
    $region8: #{tpu_custom_call.1} parent=1 // pred_region
      %s25 = ssub.s32 512, 512
      %26 = vsyncadd [#allocation6], %s25
      %s27 = sshll.u32 [#allocation5], 4
      %s28 = int_to_ptr.vmem [resolvable:$true] %s27
      %33 = dma.hbm_to_vmem [thread:$0]  %s1, 512, %s28, [#allocation6], 128, 128, 8
    $region9: #{tpu_custom_call.1} parent=1 // pred_fallthru
      _
    // Predicated region
    $region10: #{tpu_custom_call.1} parent=1 // pred_check
      _
    $region11: #{tpu_custom_call.1} parent=1 // pred_check_branch
      %35 = sbr.rel (0) target = $region13
    $region12: #{tpu_custom_call.1} parent=1 // pred_region
      %36 = dma.done [#allocation3], 256
    $region13: #{tpu_custom_call.1} parent=1 // pred_fallthru
      _
    // Predicated region
    $region14: #{tpu_custom_call.1} parent=1 // pred_check
      _
    $region15: #{tpu_custom_call.1} parent=1 // pred_check_branch
      %38 = sbr.rel (0) target = $region17
    $region16: #{tpu_custom_call.1} parent=1 // pred_region
      %39 = dma.done [#allocation6], 512
    $region17: #{tpu_custom_call.1} parent=1 // pred_fallthru
      _
    %v40 = vld [vmem:[#allocation2] sm:$0xff]
    %v41 = vld [vmem:[#allocation2 + $0x8] sm:$0xf]
    %v42 = vld [vmem:[#allocation5] sm:$0xff]
    %v43 = vld [vmem:[#allocation5 + $0x8] sm:$0xff]
    %v44 = vld [vmem:[#allocation5 + $0x10] sm:$0xff]
    %v45 = vld [vmem:[#allocation5 + $0x18] sm:$0xff]
    %vm46 = vcmask 261120
    %v48 = vsel %vm46, %v40, 0
    %v51 = vsel %vm46, %v41, 0
    %v54 = vsel %vm46, %v42, 0
    %v57 = vsel %vm46, %v43, 0
    %v60 = vsel %vm46, %v44, 0
    %v63 = vsel %vm46, %v45, 0
    %65 = vmatprep.subr.mxu0 0.0
    %66 = vmatpush1.xpose.msra.mxu0 %v54
    %67 = vmatprep.subr.mxu0 0.0
    %68 = vmatpush1.xpose.msra.mxu0 %v57
    %69 = vmatprep.subr.mxu0 0.0
    %70 = vmatpush1.xpose.msra.mxu0 %v60
    %71 = vmatprep.subr.mxu0 0.0
    %72 = vmatpush1.xpose.msra.mxu0 %v63
    %73 = vmatprep.subr.mxu0 0.0
    %74 = vmatpush1.xpose.msra.mxu0 0.0
    %75 = vmatprep.subr.mxu0 0.0
    %76 = vmatpush1.xpose.msra.mxu0 0.0
    %77 = vmatprep.subr.mxu0 0.0
    %78 = vmatpush1.xpose.msra.mxu0 0.0
    %79 = vmatprep.subr.mxu0 0.0
    %80 = vmatpush1.xpose.msra.mxu0 0.0
    %81 = vmatprep.subr.mxu0 0.0
    %82 = vmatpush1.xpose.msra.mxu0 0.0
    %83 = vmatprep.subr.mxu0 0.0
    %84 = vmatpush1.xpose.msra.mxu0 0.0
    %85 = vmatprep.subr.mxu0 0.0
    %86 = vmatpush1.xpose.msra.mxu0 0.0
    %87 = vmatprep.subr.mxu0 0.0
    %88 = vmatpush1.xpose.msra.mxu0 0.0
    %89 = vmatprep.subr.mxu0 0.0
    %90 = vmatpush1.xpose.msra.mxu0 0.0
    %91 = vmatprep.subr.mxu0 0.0
    %92 = vmatpush1.xpose.msra.mxu0 0.0
    %93 = vmatprep.subr.mxu0 0.0
    %94 = vmatpush1.xpose.msra.mxu0 0.0
    %95 = vmatprep.subr.mxu0 0.0
    %96 = vmatpush1.xpose.msra.mxu0 0.0
    %97 = vmatprep.subr.mxu0 0.0
    %98 = vmatpush1.xpose.msra.mxu0 0.0
    %99 = vmatprep.subr.mxu0 0.0
    %100 = vmatpush1.xpose.msra.mxu0 0.0
    %101 = vmatprep.subr.mxu0 0.0
    %102 = vmatpush1.xpose.msra.mxu0 0.0
    %103 = vmatprep.subr.mxu0 0.0
    %104 = vmatpush1.xpose.msra.mxu0 0.0
    %105 = vmatprep.subr.mxu0 0.0
    %106 = vmatpush1.xpose.msra.mxu0 0.0
    %107 = vmatprep.subr.mxu0 0.0
    %108 = vmatpush1.xpose.msra.mxu0 0.0
    %109 = vmatprep.subr.mxu0 0.0
    %110 = vmatpush1.xpose.msra.mxu0 0.0
    %111 = vmatprep.subr.mxu0 0.0
    %112 = vmatpush1.xpose.msra.mxu0 0.0
    %113 = vmatprep.subr.mxu0 0.0
    %114 = vmatpush1.xpose.msra.mxu0 0.0
    %115 = vmatprep.subr.mxu0 0.0
    %116 = vmatpush1.xpose.msra.mxu0 0.0
    %117 = vmatprep.subr.mxu0 0.0
    %118 = vmatpush1.xpose.msra.mxu0 0.0
    %119 = vmatprep.subr.mxu0 0.0
    %120 = vmatpush1.xpose.msra.mxu0 0.0
    %121 = vmatprep.subr.mxu0 0.0
    %122 = vmatpush1.xpose.msra.mxu0 0.0
    %123 = vmatprep.subr.mxu0 0.0
    %124 = vmatpush1.xpose.msra.mxu0 0.0
    %125 = vmatprep.subr.mxu0 0.0
    %126 = vmatpush1.xpose.msra.mxu0 0.0
    %127 = vmatprep.subr.mxu0 0.0
    %128 = vmatpush1.xpose.msra.mxu0 0.0
    %129 = vmatprep.mubr.f32.mxu0 0.0
    %130 = vmatmul.mubr.f32.gmra.mrb[0].mxu0 %v48
    %v131 = vpop.f32.mrb[0].mxu0
    %v132 = vadd.f32 0.0, %v131
    %v133 = vpop.f32.mrb[0].mxu0
    %134 = vmatprep.mubr.f32.mxu0 0.0
    %135 = vmatmul.mubr.f32.gmra.mrb[0].mxu0 %v51
    %v136 = vpop.f32.mrb[0].mxu0
    %v137 = vadd.f32 0.0, %v136
    %v138 = vpop.f32.mrb[0].mxu0
    %139 = vdwg.mxu0
    %140 = vst.msk [vmem:[#allocation7] sm:$0xff] %vm46, %v132
    %vm141 = vcmask 257024
    %142 = vst.msk [vmem:[#allocation7 + $0x8] sm:$0xf] %vm141, %v137
    // Predicated region
    $region18: #{tpu_custom_call.1} parent=1 // pred_check
      _
    $region19: #{tpu_custom_call.1} parent=1 // pred_check_branch
      %144 = sbr.rel (0) target = $region21
    $region20: #{tpu_custom_call.1} parent=1 // pred_region
      %s146 = ssub.s32 256, 256
      %147 = vsyncadd [#allocation4], %s146
      %s148 = sshll.u32 [#allocation7], 4
      %s149 = int_to_ptr.vmem [resolvable:$true] %s148
      %154 = dma.vmem_to_hbm [thread:$0]  %s149, 256, %s2, [#allocation4], 128, 128, 8
    $region21: #{tpu_custom_call.1} parent=1 // pred_fallthru
      _
    // Predicated region
    $region22: #{tpu_custom_call.1} parent=1 // pred_check
      _
    $region23: #{tpu_custom_call.1} parent=1 // pred_check_branch
      %156 = sbr.rel (0) target = $region25
    $region24: #{tpu_custom_call.1} parent=1 // pred_region
      %157 = dma.done [#allocation4], 256
    $region25: #{tpu_custom_call.1} parent=1 // pred_fallthru
      _
    %158 = vsyncpa [#allocation3], 1
    %159 = vsyncpa [#allocation6], 1
    %160 = vsyncpa [#allocation4], 1

</llo_original>
